<compile_context>
chip_gen: v6e
topology: v6e:2x2x1
jax: 0.10.0
libtpu: 0.0.40
codegen_flags: <defaults>
</compile_context>

<pallas_src>
import jax
import jax.numpy as jnp
from jax.experimental import pallas as pl
from jax.experimental.pallas import tpu as pltpu


def _outconv_kernel(w_ref, b_ref, x_ref, o_ref):
    # w_ref: SMEM (Cout, Cin) scalars     b_ref: SMEM (Cout,) scalars
    # x_ref: VMEM (Cin, ts)               o_ref: VMEM (Cout, ts)
    cin = x_ref.shape[0]
    cout = o_ref.shape[0]

    x = x_ref[...].astype(jnp.float32)            # (Cin, ts), lane-dense load

    # Channel contraction as unrolled VPU multiply-adds (no MXU for tiny C).
    for co in range(cout):
        acc = x[0:1, :] * w_ref[co, 0]            # (1, ts)
        for ci in range(1, cin):
            acc = acc + x[ci:ci + 1, :] * w_ref[co, ci]
        # Lane-dense store of one output-channel row.
        o_ref[co:co + 1, :] = (acc + b_ref[co]).astype(o_ref.dtype)


def outconv_1x1(x_nchw, weight, bias, *, max_spatial_tile=8192):
    """1x1 Conv2d forward, semantics identical to nn.Conv2d(Cin, Cout, 1).

    x_nchw : (N, Cin, H, W)
    weight : (Cout, Cin, 1, 1)
    bias   : (Cout,)
    returns: (N, Cout, H, W)
    """
    N, Cin, H, W = x_nchw.shape
    Cout = weight.shape[0]
    HW = H * W

    # Free reshapes only — no HBM transpose passes.
    x3 = x_nchw.reshape(N, Cin, HW)               # (N, Cin, HW)
    w_mat = weight.reshape(Cout, Cin)             # (Cout, Cin) -> SMEM scalars
    b_vec = bias.reshape(Cout)                    # (Cout,)     -> SMEM scalars

    # Spatial tile: multiple of 128, as large as reasonable (<= max_spatial_tile).
    ts = min(max_spatial_tile, pl.cdiv(HW, 128) * 128)
    grid = (N, pl.cdiv(HW, ts))

    itemsize = jnp.dtype(x_nchw.dtype).itemsize
    cost = pl.CostEstimate(
        flops=2 * N * HW * Cin * Cout,
        transcendentals=0,
        bytes_accessed=(N * HW * (Cin + Cout) + Cout * Cin + Cout) * itemsize,
    )

    out3 = pl.pallas_call(
        _outconv_kernel,
        out_shape=jax.ShapeDtypeStruct((N, Cout, HW), x_nchw.dtype),
        grid_spec=pltpu.PrefetchScalarGridSpec(
            num_scalar_prefetch=0,
            grid=grid,
            in_specs=[
                # Whole weight / bias live in SMEM (scalar broadcast source).
                pl.BlockSpec(memory_space=pltpu.MemorySpace.SMEM),
                pl.BlockSpec(memory_space=pltpu.MemorySpace.SMEM),
                # Activation tile: squeeze N, full Cin, lane-dense spatial tile.
                pl.BlockSpec((None, Cin, ts), lambda n, s: (n, 0, s)),
            ],
            out_specs=pl.BlockSpec((None, Cout, ts), lambda n, s: (n, 0, s)),
        ),
        compiler_params=pltpu.CompilerParams(
            dimension_semantics=("parallel", "parallel"),
            vmem_limit_bytes=32 * 1024 * 1024,   # v7x-safe (64 MiB physical VMEM)
        ),
        cost_estimate=cost,
    )(w_mat, b_vec, x3)

    return out3.reshape(N, Cout, H, W)


if __name__ == "__main__":
    # Small, module-consistent shapes: batch=2, in_channels=4, out_channels=3,
    # spatial 16x16.
    N, Cin, Cout, H, W = 2, 4, 3, 16, 16

    key = jax.random.PRNGKey(0)
    kx, kw, kb = jax.random.split(key, 3)

    x = jax.random.normal(kx, (N, Cin, H, W), dtype=jnp.float32)
    # Deterministic parameter init mimicking nn.Conv2d's uniform(-bound, bound)
    # with fan_in = Cin * 1 * 1.
    bound = 1.0 / (Cin ** 0.5)
    weight = jax.random.uniform(kw, (Cout, Cin, 1, 1), jnp.float32, -bound, bound)
    bias = jax.random.uniform(kb, (Cout,), jnp.float32, -bound, bound)

    out = jax.block_until_ready(outconv_1x1(x, weight, bias))

    # Reference check in plain JAX (same math as F.conv2d with 1x1 kernel).
    ref = jnp.einsum("nchw,oc->nohw", x, weight.reshape(Cout, Cin)) \
        + bias[None, :, None, None]
    assert out.shape == (N, Cout, H, W)
    assert jnp.allclose(out, ref, atol=1e-5, rtol=1e-5), "mismatch vs reference"

    print("KERNEL_OK")
</pallas_src>

<mosaic_0001>
module attributes {stable_mosaic.version = 11 : i64} {
  func.func @_outconv_kernel(%arg0: i32, %arg1: i32, %arg2: memref<3x4xf32, #tpu.memory_space<smem>>, %arg3: memref<3xf32, #tpu.memory_space<smem>>, %arg4: memref<1x4x256xf32, #tpu.memory_space<vmem>>, %arg5: memref<1x3x256xf32, #tpu.memory_space<vmem>>) attributes {dimension_semantics = [#tpu.dimension_semantics<parallel>, #tpu.dimension_semantics<parallel>], iteration_bounds = array<i64: 2, 1>, scalar_prefetch = 0 : i64, scratch_operands = 0 : i64, tpu.core_type = #tpu.core_type<tc>, window_params = [{transform_indices = @transform_0, window_bounds = array<i64: 3, 4>}, {transform_indices = @transform_1, window_bounds = array<i64: 3>}, {transform_indices = @transform_2, window_bounds = array<i64: 1, 4, 256>}, {transform_indices = @transform_3, window_bounds = array<i64: 1, 3, 256>}]} {
    %c0 = arith.constant 0 : index
    %c0_0 = arith.constant 0 : index
    %c0_1 = arith.constant 0 : index
    %0 = vector.load %arg4[%c0, %c0_0, %c0_1] : memref<1x4x256xf32, #tpu.memory_space<vmem>>, vector<1x4x256xf32>
    %1 = vector.shape_cast %0 : vector<1x4x256xf32> to vector<4x256xf32>
    %2 = vector.extract_strided_slice %1 {offsets = [0, 0], sizes = [1, 256], strides = [1, 1]} : vector<4x256xf32> to vector<1x256xf32>
    %c0_2 = arith.constant 0 : index
    %c0_3 = arith.constant 0 : index
    %3 = memref.load %arg2[%c0_2, %c0_3] : memref<3x4xf32, #tpu.memory_space<smem>>
    %4 = vector.broadcast %3 : f32 to vector<1x256xf32>
    %5 = arith.mulf %2, %4 : vector<1x256xf32>
    %6 = vector.extract_strided_slice %1 {offsets = [1, 0], sizes = [1, 256], strides = [1, 1]} : vector<4x256xf32> to vector<1x256xf32>
    %c0_4 = arith.constant 0 : index
    %c1 = arith.constant 1 : index
    %7 = memref.load %arg2[%c0_4, %c1] : memref<3x4xf32, #tpu.memory_space<smem>>
    %8 = vector.broadcast %7 : f32 to vector<1x256xf32>
    %9 = arith.mulf %6, %8 : vector<1x256xf32>
    %10 = arith.addf %5, %9 : vector<1x256xf32>
    %11 = vector.extract_strided_slice %1 {offsets = [2, 0], sizes = [1, 256], strides = [1, 1]} : vector<4x256xf32> to vector<1x256xf32>
    %c0_5 = arith.constant 0 : index
    %c2 = arith.constant 2 : index
    %12 = memref.load %arg2[%c0_5, %c2] : memref<3x4xf32, #tpu.memory_space<smem>>
    %13 = vector.broadcast %12 : f32 to vector<1x256xf32>
    %14 = arith.mulf %11, %13 : vector<1x256xf32>
    %15 = arith.addf %10, %14 : vector<1x256xf32>
    %16 = vector.extract_strided_slice %1 {offsets = [3, 0], sizes = [1, 256], strides = [1, 1]} : vector<4x256xf32> to vector<1x256xf32>
    %c0_6 = arith.constant 0 : index
    %c3 = arith.constant 3 : index
    %17 = memref.load %arg2[%c0_6, %c3] : memref<3x4xf32, #tpu.memory_space<smem>>
    %18 = vector.broadcast %17 : f32 to vector<1x256xf32>
    %19 = arith.mulf %16, %18 : vector<1x256xf32>
    %20 = arith.addf %15, %19 : vector<1x256xf32>
    %c0_7 = arith.constant 0 : index
    %21 = memref.load %arg3[%c0_7] : memref<3xf32, #tpu.memory_space<smem>>
    %22 = vector.broadcast %21 : f32 to vector<1x256xf32>
    %23 = arith.addf %20, %22 : vector<1x256xf32>
    %c0_8 = arith.constant 0 : index
    %c0_9 = arith.constant 0 : index
    %c0_10 = arith.constant 0 : index
    %24 = vector.load %arg5[%c0_8, %c0_9, %c0_10] : memref<1x3x256xf32, #tpu.memory_space<vmem>>, vector<1x1x256xf32>
    %25 = vector.shape_cast %24 : vector<1x1x256xf32> to vector<1x256xf32>
    %26 = vector.shape_cast %23 : vector<1x256xf32> to vector<1x1x256xf32>
    tpu.vector_store %arg5[%c0_8, %c0_9, %c0_10], %26 {strides = array<i32>} : memref<1x3x256xf32, #tpu.memory_space<vmem>>, vector<1x1x256xf32>,
    %27 = vector.extract_strided_slice %1 {offsets = [0, 0], sizes = [1, 256], strides = [1, 1]} : vector<4x256xf32> to vector<1x256xf32>
    %c1_11 = arith.constant 1 : index
    %c0_12 = arith.constant 0 : index
    %28 = memref.load %arg2[%c1_11, %c0_12] : memref<3x4xf32, #tpu.memory_space<smem>>
    %29 = vector.broadcast %28 : f32 to vector<1x256xf32>
    %30 = arith.mulf %27, %29 : vector<1x256xf32>
    %31 = vector.extract_strided_slice %1 {offsets = [1, 0], sizes = [1, 256], strides = [1, 1]} : vector<4x256xf32> to vector<1x256xf32>
    %c1_13 = arith.constant 1 : index
    %c1_14 = arith.constant 1 : index
    %32 = memref.load %arg2[%c1_13, %c1_14] : memref<3x4xf32, #tpu.memory_space<smem>>
    %33 = vector.broadcast %32 : f32 to vector<1x256xf32>
    %34 = arith.mulf %31, %33 : vector<1x256xf32>
    %35 = arith.addf %30, %34 : vector<1x256xf32>
    %36 = vector.extract_strided_slice %1 {offsets = [2, 0], sizes = [1, 256], strides = [1, 1]} : vector<4x256xf32> to vector<1x256xf32>
    %c1_15 = arith.constant 1 : index
    %c2_16 = arith.constant 2 : index
    %37 = memref.load %arg2[%c1_15, %c2_16] : memref<3x4xf32, #tpu.memory_space<smem>>
    %38 = vector.broadcast %37 : f32 to vector<1x256xf32>
    %39 = arith.mulf %36, %38 : vector<1x256xf32>
    %40 = arith.addf %35, %39 : vector<1x256xf32>
    %41 = vector.extract_strided_slice %1 {offsets = [3, 0], sizes = [1, 256], strides = [1, 1]} : vector<4x256xf32> to vector<1x256xf32>
    %c1_17 = arith.constant 1 : index
    %c3_18 = arith.constant 3 : index
    %42 = memref.load %arg2[%c1_17, %c3_18] : memref<3x4xf32, #tpu.memory_space<smem>>
    %43 = vector.broadcast %42 : f32 to vector<1x256xf32>
    %44 = arith.mulf %41, %43 : vector<1x256xf32>
    %45 = arith.addf %40, %44 : vector<1x256xf32>
    %c1_19 = arith.constant 1 : index
    %46 = memref.load %arg3[%c1_19] : memref<3xf32, #tpu.memory_space<smem>>
    %47 = vector.broadcast %46 : f32 to vector<1x256xf32>
    %48 = arith.addf %45, %47 : vector<1x256xf32>
    %c0_20 = arith.constant 0 : index
    %c1_21 = arith.constant 1 : index
    %c0_22 = arith.constant 0 : index
    %49 = vector.load %arg5[%c0_20, %c1_21, %c0_22] : memref<1x3x256xf32, #tpu.memory_space<vmem>>, vector<1x1x256xf32>
    %50 = vector.shape_cast %49 : vector<1x1x256xf32> to vector<1x256xf32>
    %51 = vector.shape_cast %48 : vector<1x256xf32> to vector<1x1x256xf32>
    tpu.vector_store %arg5[%c0_20, %c1_21, %c0_22], %51 {strides = array<i32>} : memref<1x3x256xf32, #tpu.memory_space<vmem>>, vector<1x1x256xf32>,
    %52 = vector.extract_strided_slice %1 {offsets = [0, 0], sizes = [1, 256], strides = [1, 1]} : vector<4x256xf32> to vector<1x256xf32>
    %c2_23 = arith.constant 2 : index
    %c0_24 = arith.constant 0 : index
    %53 = memref.load %arg2[%c2_23, %c0_24] : memref<3x4xf32, #tpu.memory_space<smem>>
    %54 = vector.broadcast %53 : f32 to vector<1x256xf32>
    %55 = arith.mulf %52, %54 : vector<1x256xf32>
    %56 = vector.extract_strided_slice %1 {offsets = [1, 0], sizes = [1, 256], strides = [1, 1]} : vector<4x256xf32> to vector<1x256xf32>
    %c2_25 = arith.constant 2 : index
    %c1_26 = arith.constant 1 : index
    %57 = memref.load %arg2[%c2_25, %c1_26] : memref<3x4xf32, #tpu.memory_space<smem>>
    %58 = vector.broadcast %57 : f32 to vector<1x256xf32>
    %59 = arith.mulf %56, %58 : vector<1x256xf32>
    %60 = arith.addf %55, %59 : vector<1x256xf32>
    %61 = vector.extract_strided_slice %1 {offsets = [2, 0], sizes = [1, 256], strides = [1, 1]} : vector<4x256xf32> to vector<1x256xf32>
    %c2_27 = arith.constant 2 : index
    %c2_28 = arith.constant 2 : index
    %62 = memref.load %arg2[%c2_27, %c2_28] : memref<3x4xf32, #tpu.memory_space<smem>>
    %63 = vector.broadcast %62 : f32 to vector<1x256xf32>
    %64 = arith.mulf %61, %63 : vector<1x256xf32>
    %65 = arith.addf %60, %64 : vector<1x256xf32>
    %66 = vector.extract_strided_slice %1 {offsets = [3, 0], sizes = [1, 256], strides = [1, 1]} : vector<4x256xf32> to vector<1x256xf32>
    %c2_29 = arith.constant 2 : index
    %c3_30 = arith.constant 3 : index
    %67 = memref.load %arg2[%c2_29, %c3_30] : memref<3x4xf32, #tpu.memory_space<smem>>
    %68 = vector.broadcast %67 : f32 to vector<1x256xf32>
    %69 = arith.mulf %66, %68 : vector<1x256xf32>
    %70 = arith.addf %65, %69 : vector<1x256xf32>
    %c2_31 = arith.constant 2 : index
    %71 = memref.load %arg3[%c2_31] : memref<3xf32, #tpu.memory_space<smem>>
    %72 = vector.broadcast %71 : f32 to vector<1x256xf32>
    %73 = arith.addf %70, %72 : vector<1x256xf32>
    %c0_32 = arith.constant 0 : index
    %c2_33 = arith.constant 2 : index
    %c0_34 = arith.constant 0 : index
    %74 = vector.load %arg5[%c0_32, %c2_33, %c0_34] : memref<1x3x256xf32, #tpu.memory_space<vmem>>, vector<1x1x256xf32>
    %75 = vector.shape_cast %74 : vector<1x1x256xf32> to vector<1x256xf32>
    %76 = vector.shape_cast %73 : vector<1x256xf32> to vector<1x1x256xf32>
    tpu.vector_store %arg5[%c0_32, %c2_33, %c0_34], %76 {strides = array<i32>} : memref<1x3x256xf32, #tpu.memory_space<vmem>>, vector<1x1x256xf32>,
    return
  }
  func.func @transform_0(%arg0: i32, %arg1: i32) -> (i32, i32) {
    %c0_i32 = arith.constant 0 : i32
    %c0_i32_0 = arith.constant 0 : i32
    %c0_i32_1 = arith.constant 0 : i32
    return %c0_i32, %c0_i32_0 : i32, i32
  }
  func.func @transform_1(%arg0: i32, %arg1: i32) -> i32 {
    %c0_i32 = arith.constant 0 : i32
    %c0_i32_0 = arith.constant 0 : i32
    return %c0_i32 : i32
  }
  func.func @transform_2(%arg0: i32, %arg1: i32) -> (i32, i32, i32) {
    %c0_i32 = arith.constant 0 : i32
    %c0_i32_0 = arith.constant 0 : i32
    return %arg0, %c0_i32, %arg1 : i32, i32, i32
  }
  func.func @transform_3(%arg0: i32, %arg1: i32) -> (i32, i32, i32) {
    %c0_i32 = arith.constant 0 : i32
    %c0_i32_0 = arith.constant 0 : i32
    return %arg0, %c0_i32, %arg1 : i32, i32, i32
  }
}

</mosaic_0001>

<llo_original>
// kernel: tpu_custom_call.1
$region0: #{tpu_custom_call.1}
  #allocation0 [shape = 'u32[]', space=smem, size = 0x4, offset = 0x4, fixed_abs, tag = 'smem constant byte address 0x4 - core index']
  #allocation1 [shape = 'u32[144,128]{1,0:T(1,128)}', space=vmem, size = 0x12000, scoped, tag = 'internal scratch']
  %s0 = inlined_call_operand.hbm [shape: f32[3,4], index: 0, kind: input, shape index: {}]
  %s1 = inlined_call_operand.vmem [shape: f32[3], index: 1, kind: input, shape index: {}]
  %s2 = inlined_call_operand.hbm [shape: f32[2,4,256], index: 2, kind: input, shape index: {}]
  %s3 = inlined_call_operand.vmem [shape: f32[2,3,256], index: 3, kind: output, shape index: {}]
  %s4 = sld [smem:[#allocation0]]
  $region57: #{tpu_custom_call.1} parent=0
    _
  %s6 = ssub.s32 1, %s4
  %s7 = scalar_select 0, %s6, %s4
  $region1: #{tpu_custom_call.1} parent=0
    #allocation2 [shape = 'u8[2048]{0}', space=smem, size = 0x800, scoped, tag = 'input window, operand 0, single buffered']
    #allocation3 [shape = 's32[2]{0}', space=sflag, size = 0x8, scoped, tag = 'scoped memory for tpu_custom_call.1']
    #allocation4 [shape = 's32[2]{0}', space=sflag, size = 0x8, scoped, tag = 'scoped memory for tpu_custom_call.1']
    #allocation5 [shape = 's32[2]{0}', space=sflag, size = 0x8, scoped, tag = 'scoped memory for tpu_custom_call.1']
    #allocation6 [shape = 'u8[512]{0}', space=smem, size = 0x200, scoped, tag = 'input window, operand 1, single buffered']
    #allocation7 [shape = 'u8[8192]{0}', space=vmem, size = 0x2000, scoped, tag = 'input window, operand 2']
    %8 = vsyncpa [#allocation4], 0
    %9 = vsyncpa [#allocation5], 0
    %10 = vsyncpa [#allocation3], 0
    %s11 = scalar_lea.sflag [#allocation3], 1
    %12 = vsyncpa %s11, 0
    loop: start=0, step=1, limit=4
    $region2: #{tpu_custom_call.1} parent=1 // loop_pre_header
      _
    $region3: #{tpu_custom_call.1} parent=1 // loop_header
      %s14 = sphi 0, %s18
      %p15 = scmp.ge.s32.totalorder %s14, 4
      %s21 = sphi 0, %s33
      %s22 = sphi 0, %s29
      %s23 = sphi 0, %s21
      %s24 = sphi 0, %s22
      %s25 = sphi 0, %s23
      %s26 = sphi 0, %s24
      %s34 = sphi 0, %s34
      %s36 = sphi 0, %s34
      %s37 = sphi 0, %s36
      %s51 = sphi 0, %s37
      %s55 = sphi 0, %s55
      %s57 = sphi 0, %s55
      %s58 = sphi 0, %s57
      %s72 = sphi 0, %s58
      %s80 = sphi 0, %s82
      %s83 = sphi 0, %s80
      %s84 = sphi 0, %s83
      %s100 = sphi 0, %s84
      %s108 = sphi 0, %s110
      %s111 = sphi 0, %s108
      %s112 = sphi 0, %s111
      %s128 = sphi 0, %s112
    $region4: #{tpu_custom_call.1} parent=1 // loop_header_branch
      %17 = sbr.rel (%p15) target = $region8
    $region5: #{tpu_custom_call.1} parent=1 // loop_body
      %s19 = ssub.s32 %s14, 1
      %s20 = ssub.s32 %s14, 2
      %s27 = sadd.s32 1, %s22
      %p28 = scmp.ge.s32.totalorder %s27, 1
      %s29 = scalar_select %p28, 0, %s27
      %s30 = sadd.s32 1, %s21
      %s31 = scalar_select %p28, %s30, %s21
      %p32 = scmp.ge.s32.totalorder %s31, 2
      %s33 = scalar_select %p32, 0, %s31
      %s35 = sadd.s32 %s34, 1
      %p38 = scmp.eq.s32.totalorder %s14, 1
      %p39 = scmp.ne.s32.totalorder %s34, %s36
      %p40 = scmp.eq.s32.totalorder %s14, 0
      %p41 = por %p39, %p40
      %p42 = scmp.ne.s32.totalorder %s34, %s36
      %p43 = scmp.eq.s32.totalorder %s19, 1
      %p44 = por %p42, %p43
      %p45 = scmp.ne.s32.totalorder %s36, %s37
      %p46 = scmp.eq.s32.totalorder %s19, 0
      %p47 = por %p45, %p46
      %p48 = scmp.ne.s32.totalorder %s36, %s37
      %p49 = scmp.eq.s32.totalorder %s20, 1
      %p50 = por %p48, %p49
      %p52 = scmp.ne.s32.totalorder %s37, %s51
      %p53 = scmp.eq.s32.totalorder %s20, 0
      %p54 = por %p52, %p53
      %s56 = sadd.s32 %s55, 1
      %p59 = scmp.eq.s32.totalorder %s14, 1
      %p60 = scmp.ne.s32.totalorder %s55, %s57
      %p61 = scmp.eq.s32.totalorder %s14, 0
      %p62 = por %p60, %p61
      %p63 = scmp.ne.s32.totalorder %s55, %s57
      %p64 = scmp.eq.s32.totalorder %s19, 1
      %p65 = por %p63, %p64
      %p66 = scmp.ne.s32.totalorder %s57, %s58
      %p67 = scmp.eq.s32.totalorder %s19, 0
      %p68 = por %p66, %p67
      %p69 = scmp.ne.s32.totalorder %s57, %s58
      %p70 = scmp.eq.s32.totalorder %s20, 1
      %p71 = por %p69, %p70
      %p73 = scmp.ne.s32.totalorder %s58, %s72
      %p74 = scmp.eq.s32.totalorder %s20, 0
      %p75 = por %p73, %p74
      %s76 = ssub.s32 %s21, %s33
      %s77 = ssub.s32 %s22, %s29
      %s78 = sor.u32 %s76, %s77
      %p79 = scmp.eq.s32.totalorder %s78, 0
      %s81 = sadd.s32 %s80, 1
      %s82 = scalar_select %p79, %s80, %s81
      %p85 = pneg %p79
      %p86 = scmp.eq.s32.totalorder %s14, 1
      %p87 = por %p85, %p86
      %p88 = scmp.ne.s32.totalorder %s80, %s83
      %p89 = scmp.eq.s32.totalorder %s14, 0
      %p90 = por %p88, %p89
      %p91 = scmp.ne.s32.totalorder %s80, %s83
      %p92 = scmp.eq.s32.totalorder %s19, 1
      %p93 = por %p91, %p92
      %p94 = scmp.ne.s32.totalorder %s83, %s84
      %p95 = scmp.eq.s32.totalorder %s19, 0
      %p96 = por %p94, %p95
      %p97 = scmp.ne.s32.totalorder %s83, %s84
      %p98 = scmp.eq.s32.totalorder %s20, 1
      %p99 = por %p97, %p98
      %p101 = scmp.ne.s32.totalorder %s84, %s100
      %p102 = scmp.eq.s32.totalorder %s20, 0
      %p103 = por %p101, %p102
      %s104 = ssub.s32 %s21, %s33
      %s105 = ssub.s32 %s22, %s29
      %s106 = sor.u32 %s104, %s105
      %p107 = scmp.eq.s32.totalorder %s106, 0
      %s109 = sadd.s32 %s108, 1
      %s110 = scalar_select %p107, %s108, %s109
      %p113 = pneg %p107
      %p114 = scmp.eq.s32.totalorder %s14, 1
      %p115 = por %p113, %p114
      %p116 = scmp.ne.s32.totalorder %s108, %s111
      %p117 = scmp.eq.s32.totalorder %s14, 0
      %p118 = por %p116, %p117
      %p119 = scmp.ne.s32.totalorder %s108, %s111
      %p120 = scmp.eq.s32.totalorder %s19, 1
      %p121 = por %p119, %p120
      %p122 = scmp.ne.s32.totalorder %s111, %s112
      %p123 = scmp.eq.s32.totalorder %s19, 0
      %p124 = por %p122, %p123
      %p125 = scmp.ne.s32.totalorder %s111, %s112
      %p126 = scmp.eq.s32.totalorder %s20, 1
      %p127 = por %p125, %p126
      %p129 = scmp.ne.s32.totalorder %s112, %s128
      %p130 = scmp.eq.s32.totalorder %s20, 0
      %p131 = por %p129, %p130
      %p132 = scmp.le.s32.totalorder 1, %s14
      %p133 = scmp.lt.s32.totalorder %s14, 3
      %p134 = pnand %p132, %p133
      %p135 = pneg %p134
      // Predicated region
      $region9: #{tpu_custom_call.1} parent=5 // pred_check
        _
      $region10: #{tpu_custom_call.1} parent=5 // pred_check_branch
        %137 = sbr.rel (%p134) target = $region12
      $region11: #{tpu_custom_call.1} parent=5 // pred_region
        %s138 = ssub.s32 %s14, 1
        // Predicated region
        $region13: #{tpu_custom_call.1} parent=11 // pred_check
          %p139 = pneg %p47
        $region14: #{tpu_custom_call.1} parent=11 // pred_check_branch
          %141 = sbr.rel (%p139) target = $region16
        $region15: #{tpu_custom_call.1} parent=11 // pred_region
          %s143 = ssub.s32 64, 64
          %144 = vsyncadd [#allocation4], %s143
          %147 = dma.hbm_to_smem %s0, 64, [#allocation2], [#allocation4]
        $region16: #{tpu_custom_call.1} parent=11 // pred_fallthru
          _
        // Predicated region
        $region17: #{tpu_custom_call.1} parent=11 // pred_check
          %p148 = pneg %p68
        $region18: #{tpu_custom_call.1} parent=11 // pred_check_branch
          %150 = sbr.rel (%p148) target = $region20
        $region19: #{tpu_custom_call.1} parent=11 // pred_region
          %s152 = ssub.s32 16, 16
          %153 = vsyncadd [#allocation5], %s152
          %s155 = sshll.u32 %s1, 4
          %s156 = int_to_ptr.vmem [resolvable:$true] %s155
          %158 = dma.vmem_to_smem %s156, 16, [#allocation6], [#allocation5]
        $region20: #{tpu_custom_call.1} parent=11 // pred_fallthru
          _
      $region12: #{tpu_custom_call.1} parent=5 // pred_fallthru
        _
      %p159 = scmp.lt.s32.totalorder %s14, 2
      // Predicated region
      $region21: #{tpu_custom_call.1} parent=5 // pred_check
        %p160 = pneg %p159
      $region22: #{tpu_custom_call.1} parent=5 // pred_check_branch
        %162 = sbr.rel (%p160) target = $region24
      $region23: #{tpu_custom_call.1} parent=5 // pred_region
        // Predicated region
        $region25: #{tpu_custom_call.1} parent=23 // pred_check
          %p163 = pneg %p90
        $region26: #{tpu_custom_call.1} parent=23 // pred_check_branch
          %165 = sbr.rel (%p163) target = $region28
        $region27: #{tpu_custom_call.1} parent=23 // pred_region
          %s166 = sand.u32 %s80, 1
          %s167 = scalar_lea.sflag [#allocation3], %s166
          %s168 = sand.u32 %s80, 1
          %s169 = smul.addr %s168, 8
          %s170 = scalar_lea.vmem [#allocation7], %s169
          %s171 = smul.u32 2, %s22
          %s173 = ssub.s32 128, 128
          %174 = vsyncadd %s167, %s173
          %s175 = smul.addr %s21, 2
          %s176 = sadd.s32 %s171, %s175
          %s177 = smul.addr %s176, 64
          %s178 = scalar_lea.hbm %s2, %s177
          %s180 = sshll.u32 %s170, 4
          %s181 = int_to_ptr.vmem [resolvable:$true] %s180
          %183 = dma.hbm_to_vmem [thread:$0]  %s178, 128, %s181, %s167
        $region28: #{tpu_custom_call.1} parent=23 // pred_fallthru
          _
      $region24: #{tpu_custom_call.1} parent=5 // pred_fallthru
        _
      %p184 = scmp.le.s32.totalorder 1, %s14
      %p185 = scmp.lt.s32.totalorder %s14, 3
      %p186 = pnand %p184, %p185
      %p187 = pneg %p186
      // Predicated region
      $region29: #{tpu_custom_call.1} parent=5 // pred_check
        _
      $region30: #{tpu_custom_call.1} parent=5 // pred_check_branch
        %189 = sbr.rel (%p186) target = $region32
      $region31: #{tpu_custom_call.1} parent=5 // pred_region
        %s190 = ssub.s32 %s14, 1
        // Predicated region
        $region33: #{tpu_custom_call.1} parent=31 // pred_check
          %p191 = pneg %p47
        $region34: #{tpu_custom_call.1} parent=31 // pred_check_branch
          %193 = sbr.rel (%p191) target = $region36
        $region35: #{tpu_custom_call.1} parent=31 // pred_region
          %194 = dma.done [#allocation4], 64
        $region36: #{tpu_custom_call.1} parent=31 // pred_fallthru
          _
        // Predicated region
        $region37: #{tpu_custom_call.1} parent=31 // pred_check
          %p195 = pneg %p68
        $region38: #{tpu_custom_call.1} parent=31 // pred_check_branch
          %197 = sbr.rel (%p195) target = $region40
        $region39: #{tpu_custom_call.1} parent=31 // pred_region
          %198 = dma.done [#allocation5], 16
        $region40: #{tpu_custom_call.1} parent=31 // pred_fallthru
          _
        %s199 = sand.u32 %s83, 1
        %s200 = scalar_lea.sflag [#allocation3], %s199
        %s201 = sand.u32 %s83, 1
        %s202 = smul.addr %s201, 8
        %s203 = scalar_lea.vmem [#allocation7], %s202
        // Predicated region
        $region41: #{tpu_custom_call.1} parent=31 // pred_check
          %p204 = pneg %p96
        $region42: #{tpu_custom_call.1} parent=31 // pred_check_branch
          %206 = sbr.rel (%p204) target = $region44
        $region43: #{tpu_custom_call.1} parent=31 // pred_region
          %207 = dma.done %s200, 128
        $region44: #{tpu_custom_call.1} parent=31 // pred_fallthru
          _
        %208 = sfence
        %p209 = pneg %p47
        %p210 = pneg %p44
        %p211 = pneg %p68
        %p212 = pneg %p65
        %s213 = sand.u32 %s83, 1
        %s214 = scalar_lea.sflag [#allocation3], %s213
        %s215 = sand.u32 %s83, 1
        %s216 = smul.addr %s215, 8
        %s217 = scalar_lea.vmem [#allocation7], %s216
        %p218 = pneg %p96
        %p219 = pneg %p93
        %p220 = pneg %p124
        %p221 = pneg %p121
        %s222 = smul.u32 2, %s24
        %p223 = scmp.lt.s32.totalorder %s23, 1
        %s224 = scalar_select %p223, %s23, 1
        %p225 = scmp.lt.s32.totalorder %s222, 1
        %s226 = scalar_select %p225, %s222, 1
        %s227 = smul.addr %s224, 2
        %s228 = sadd.s32 %s226, %s227
        %s229 = smul.addr %s228, 4
        %s230 = scalar_lea.vmem %s3, %s229
        %s231 = smul.u32 2, %s24
        %s232 = smul.u32 2, %s24
        %p233 = scmp.lt.s32.totalorder %s23, 1
        %s234 = scalar_select %p233, %s23, 1
        %p235 = scmp.lt.s32.totalorder %s232, 1
        %s236 = scalar_select %p235, %s232, 1
        %s237 = smul.addr %s234, 2
        %s238 = sadd.s32 %s236, %s237
        %s239 = smul.addr %s238, 4
        %s240 = scalar_lea.vmem %s3, %s239
        %s241 = smul.u32 2, %s24
        %v242 = vld [vmem:[%s203] sm:$0xff]
        %s243 = sld [smem:[#allocation2]]
        %v244 = vstv %s243
        %v245 = vmul.f32 %v242, %v244
        %s246 = sld [smem:[#allocation2 + $0x1]]
        %v247 = vstv %s246
        %v248 = vmul.f32 %v242, %v247
        %v250 = vrot.slane %v248, 5
        %v251 = vrot.slane %v250, 4
        %v253 = vadd.f32 %v245, %v251
        %s254 = sld [smem:[#allocation2 + $0x2]]
        %v255 = vstv %s254
        %v256 = vmul.f32 %v242, %v255
        %v258 = vrot.slane %v256, 6
        %v259 = vrot.slane %v258, 4
        %v261 = vadd.f32 %v253, %v259
        %s262 = sld [smem:[#allocation2 + $0x3]]
        %v263 = vstv %s262
        %v264 = vmul.f32 %v242, %v263
        %v266 = vrot.slane %v264, 7
        %v267 = vrot.slane %v266, 4
        %v269 = vadd.f32 %v261, %v267
        %s270 = sld [smem:[#allocation6]]
        %v271 = vstv %s270
        %v272 = vadd.f32 %v269, %v271
        %v275 = vunpack.c.l.s4 1966171168
        %v276 = vunpack.c.0.s8 %v275
        %v277 = vlaneseq
        %v278 = vshrl.u32 %v277, 7
        %v279 = vsub.s32 %v276, %v278
        %v280 = vrot.slane %v272, %v279
        %v282 = vunpack.c.l.s4 1966171168
        %v283 = vunpack.c.0.s8 %v282
        %v284 = vlaneseq
        %v285 = vshrl.u32 %v284, 7
        %v286 = vsub.s32 %v283, %v285
        %v287 = vrot.slane %v280, %v286
        %v289 = vlaneseq
        %vm290 = vcmp.ge.s32.totalorder %v289, 0
        %vm291 = vcmp.lt.s32.totalorder %v289, 256
        %vm292 = vmand %vm290, %vm291
        %293 = vst.msk [vmem:[%s240] ss:$4 sm:$0x3] %vm292, %v287
        %s294 = sld [smem:[#allocation2 + $0x80]]
        %v295 = vstv %s294
        %v296 = vmul.f32 %v242, %v295
        %s297 = sld [smem:[#allocation2 + $0x81]]
        %v298 = vstv %s297
        %v299 = vmul.f32 %v242, %v298
        %v301 = vrot.slane %v299, 5
        %v302 = vrot.slane %v301, 4
        %v304 = vadd.f32 %v296, %v302
        %s305 = sld [smem:[#allocation2 + $0x82]]
        %v306 = vstv %s305
        %v307 = vmul.f32 %v242, %v306
        %v309 = vrot.slane %v307, 6
        %v310 = vrot.slane %v309, 4
        %v312 = vadd.f32 %v304, %v310
        %s313 = sld [smem:[#allocation2 + $0x83]]
        %v314 = vstv %s313
        %v315 = vmul.f32 %v242, %v314
        %v317 = vrot.slane %v315, 7
        %v318 = vrot.slane %v317, 4
        %v320 = vadd.f32 %v312, %v318
        %s321 = sld [smem:[#allocation6 + $0x1]]
        %v322 = vstv %s321
        %v323 = vadd.f32 %v320, %v322
        %v326 = vunpack.c.l.s4 1966171168
        %v327 = vunpack.c.0.s8 %v326
        %v328 = vlaneseq
        %v329 = vshrl.u32 %v328, 7
        %v330 = vsub.s32 %v327, %v329
        %v331 = vrot.slane %v323, %v330
        %v333 = vunpack.c.l.s4 1966171168
        %v334 = vunpack.c.0.s8 %v333
        %v335 = vlaneseq
        %v336 = vshrl.u32 %v335, 7
        %v337 = vsub.s32 %v334, %v336
        %v338 = vrot.slane %v331, %v337
        %s340 = scalar_lea.vmem %s240, 1
        %341 = vst.msk [vmem:[%s340] ss:$4 sm:$0x3] %vm292, %v338
        %s342 = sld [smem:[#allocation2 + $0x100]]
        %v343 = vstv %s342
        %v344 = vmul.f32 %v242, %v343
        %s345 = sld [smem:[#allocation2 + $0x101]]
        %v346 = vstv %s345
        %v347 = vmul.f32 %v242, %v346
        %v349 = vrot.slane %v347, 5
        %v350 = vrot.slane %v349, 4
        %v352 = vadd.f32 %v344, %v350
        %s353 = sld [smem:[#allocation2 + $0x102]]
        %v354 = vstv %s353
        %v355 = vmul.f32 %v242, %v354
        %v357 = vrot.slane %v355, 6
        %v358 = vrot.slane %v357, 4
        %v360 = vadd.f32 %v352, %v358
        %s361 = sld [smem:[#allocation2 + $0x103]]
        %v362 = vstv %s361
        %v363 = vmul.f32 %v242, %v362
        %v365 = vrot.slane %v363, 7
        %v366 = vrot.slane %v365, 4
        %v368 = vadd.f32 %v360, %v366
        %s369 = sld [smem:[#allocation6 + $0x2]]
        %v370 = vstv %s369
        %v371 = vadd.f32 %v368, %v370
        %v374 = vunpack.c.l.s4 1966171168
        %v375 = vunpack.c.0.s8 %v374
        %v376 = vlaneseq
        %v377 = vshrl.u32 %v376, 7
        %v378 = vsub.s32 %v375, %v377
        %v379 = vrot.slane %v371, %v378
        %v381 = vunpack.c.l.s4 1966171168
        %v382 = vunpack.c.0.s8 %v381
        %v383 = vlaneseq
        %v384 = vshrl.u32 %v383, 7
        %v385 = vsub.s32 %v382, %v384
        %v386 = vrot.slane %v379, %v385
        %s388 = scalar_lea.vmem %s240, 2
        %389 = vst.msk [vmem:[%s388] ss:$4 sm:$0x3] %vm292, %v386
        %s390 = smul.u32 2, %s24
        %p391 = scmp.lt.s32.totalorder %s23, 1
        %s392 = scalar_select %p391, %s23, 1
        %p393 = scmp.lt.s32.totalorder %s390, 1
        %s394 = scalar_select %p393, %s390, 1
        %s395 = smul.addr %s392, 2
        %s396 = sadd.s32 %s394, %s395
        %s397 = smul.addr %s396, 4
        %s398 = scalar_lea.vmem %s3, %s397
        // Predicated region
        $region45: #{tpu_custom_call.1} parent=31 // pred_check
          %p399 = pneg %p121
        $region46: #{tpu_custom_call.1} parent=31 // pred_check_branch
          %401 = sbr.rel (%p399) target = $region48
        $region47: #{tpu_custom_call.1} parent=31 // pred_region
          %s402 = smul.u32 2, %s24
        $region48: #{tpu_custom_call.1} parent=31 // pred_fallthru
          _
      $region32: #{tpu_custom_call.1} parent=5 // pred_fallthru
        _
      %p403 = scmp.le.s32.totalorder 2, %s14
      // Predicated region
      $region49: #{tpu_custom_call.1} parent=5 // pred_check
        %p404 = pneg %p403
      $region50: #{tpu_custom_call.1} parent=5 // pred_check_branch
        %406 = sbr.rel (%p404) target = $region52
      $region51: #{tpu_custom_call.1} parent=5 // pred_region
        %s407 = ssub.s32 %s14, 2
        // Predicated region
        $region53: #{tpu_custom_call.1} parent=51 // pred_check
          %p408 = pneg %p127
        $region54: #{tpu_custom_call.1} parent=51 // pred_check_branch
          %410 = sbr.rel (%p408) target = $region56
        $region55: #{tpu_custom_call.1} parent=51 // pred_region
          %s411 = smul.u32 2, %s26
          %p412 = scmp.lt.s32.totalorder %s25, 1
          %s413 = scalar_select %p412, %s25, 1
          %p414 = scmp.lt.s32.totalorder %s411, 1
          %s415 = scalar_select %p414, %s411, 1
          %s416 = smul.addr %s413, 2
          %s417 = sadd.s32 %s415, %s416
          %s418 = smul.addr %s417, 4
          %s419 = scalar_lea.vmem %s3, %s418
        $region56: #{tpu_custom_call.1} parent=51 // pred_fallthru
          _
      $region52: #{tpu_custom_call.1} parent=5 // pred_fallthru
        _
    $region6: #{tpu_custom_call.1} parent=1 // loop_footer
      %s18 = sadd.s32 1, %s14
    $region7: #{tpu_custom_call.1} parent=1 // loop_footer_branch
      %13 = sbr.rel target = $region3
    $region8: #{tpu_custom_call.1} parent=1 // loop_exit
      _
    %420 = vsyncpa [#allocation3], 1
    %s421 = scalar_lea.sflag [#allocation3], 1
    %422 = vsyncpa %s421, 1
    %423 = vsyncpa [#allocation4], 1
    %s424 = scalar_lea.sflag [#allocation4], 1
    %425 = vsyncpa %s424, 1
    %426 = vsyncpa [#allocation5], 1
    %s427 = scalar_lea.sflag [#allocation5], 1
    %428 = vsyncpa %s427, 1

</llo_original>
